<compile_context>
chip_gen: v5e
topology: v5e:2x2
jax: 0.10.0
libtpu: 0.0.40
codegen_flags: <defaults>
</compile_context>

<pallas_src>
import functools
import math

import jax
import jax.numpy as jnp
from jax import lax
from jax.experimental import pallas as pl
from jax.experimental.pallas import tpu as pltpu


def _round_up(n, m):
    return ((n + m - 1) // m) * m


def _asin_poly(x):
    """float32 arcsin for x in [0, 1] using only mul/add/sqrt/select.

    Cephes asinf scheme (abs err ~1e-7).  Avoids depending on a Mosaic
    lowering for lax.asin_p; every op here is guaranteed to lower.
    """
    big = x > 0.5
    z_big = 0.5 * (1.0 - x)
    z = jnp.where(big, z_big, x * x)
    s = jnp.where(big, jnp.sqrt(z_big), x)
    p = ((((4.2163199048e-2 * z + 2.4181311049e-2) * z + 4.5470025998e-2) * z
          + 7.4953002686e-2) * z + 1.6666752422e-1)
    r = s + s * (z * p)
    return jnp.where(big, (0.5 * math.pi) - 2.0 * r, r)


def _prompt_kernel(x_ref, e_ref, o_ref, *, n_rows, block_rows,
                   embed_prenormalized, ragged):
    """Per row-tile: fused normalized-distance -> arcsin^2 -> row partial sums.

    x_ref: (TB, D) f32 tile of `input` rows (edge tile may contain OOB junk).
    e_ref: (E, D)  f32 full embed (resident across grid steps).
    o_ref: (TB, 1) f32 per-row sum over E of 2*arcsin(||xn-en||/2)^2,
           with rows >= n_rows written as 0.
    """
    eps_sq = 1e-24  # (F.normalize eps = 1e-12)^2
    x = x_ref[...]

    xn = x * lax.rsqrt(jnp.maximum(jnp.sum(x * x, axis=-1, keepdims=True), eps_sq))
    if embed_prenormalized:
        en = e_ref[...]
    else:
        e = e_ref[...]
        en = e * lax.rsqrt(jnp.maximum(jnp.sum(e * e, axis=-1, keepdims=True),
                                       eps_sq))

    # Gram matrix on the MXU; for unit vectors ||xn - en||/2 = sqrt((1-sim)/2).
    sim = lax.dot_general(xn, en, (((1,), (1,)), ((), ())),
                          preferred_element_type=jnp.float32)      # (TB, E)
    sim = jnp.clip(sim, -1.0, 1.0)          # guard arcsin against >1 roundoff
    half = jnp.sqrt(0.5 * (1.0 - sim))      # in [0, 1]

    dists = 2.0 * jnp.square(_asin_poly(half))
    row_sum = jnp.sum(dists, axis=-1, keepdims=True)               # (TB, 1)

    if ragged:
        row = (lax.broadcasted_iota(jnp.int32, row_sum.shape, 0)
               + pl.program_id(0) * block_rows)
        row_sum = jnp.where(row < n_rows, row_sum, 0.0)
    o_ref[...] = row_sum


def prompt_forward(input, embed, weight=1.0, stop=float("-inf")):
    """Forward pass of Prompt.  input: (B, D); embed: (E, D); returns a scalar."""
    del stop  # forward path of ReplaceGrad ignores `stop` (gradient-only clamp)
    B, D = input.shape
    E, De = embed.shape
    assert D == De, "input and embed must share the feature dimension"

    x = input if input.dtype == jnp.float32 else input.astype(jnp.float32)
    e = embed if embed.dtype == jnp.float32 else embed.astype(jnp.float32)

    # Row tiling: one full-array block for tiny B (no padding, no masking),
    # otherwise sublane-aligned tiles with nb >= 2 so v7x megacore uses both TCs.
    if B <= 8:
        TB = B
    else:
        TB = min(512, _round_up((B + 1) // 2, 8))
    nb = -(-B // TB)
    ragged = (nb * TB != B)

    embed_prenorm = nb > 1
    if embed_prenorm:
        # Hoist the (E, D) normalization out of the per-tile loop.
        e = e * lax.rsqrt(jnp.maximum(jnp.sum(e * e, axis=-1, keepdims=True),
                                      1e-24))

    kernel = functools.partial(
        _prompt_kernel, n_rows=B, block_rows=TB,
        embed_prenormalized=embed_prenorm, ragged=ragged)

    embed_spec = pl.BlockSpec((E, D), lambda i: (0, 0))
    if 2 * E * D * 4 > 24 * 1024 * 1024:
        # Codebook-sized embed: its index_map is constant, so a single buffer
        # is enough and keeps the resident footprint inside v7x's 64 MiB VMEM.
        embed_spec = pl.BlockSpec((E, D), lambda i: (0, 0),
                                  pipeline_mode=pl.Buffered(1))

    # NOTE: for genuinely MXU-bound shapes on v6e/v7x one could cast xn/en to
    # bf16 before the dot (keeping f32 accumulation) and round E up to 256;
    # at typical Prompt shapes this op is overhead-bound, so f32 is kept.
    row_sums = pl.pallas_call(
        kernel,
        out_shape=jax.ShapeDtypeStruct((nb * TB, 1), jnp.float32),
        grid_spec=pltpu.PrefetchScalarGridSpec(
            num_scalar_prefetch=0,
            grid=(nb,),
            in_specs=[
                pl.BlockSpec((TB, D), lambda i: (i, 0)),   # input row tile
                embed_spec,                                # embed, resident
            ],
            out_specs=pl.BlockSpec((TB, 1), lambda i: (i, 0)),
        ),
        compiler_params=pltpu.CompilerParams(
            dimension_semantics=("parallel",),
        ),
    )(x, e)

    # abs(w) * mean(dists * sign(w)) == w * mean(dists) for every real w.
    w = jnp.asarray(weight, jnp.float32)
    return w * (jnp.sum(row_sums) / (B * E))


def _prompt_forward_ref(input, embed, weight):
    """Pure-JAX reference mirroring the PyTorch forward (for self-check)."""
    eps = 1e-12
    x = input.astype(jnp.float32)
    e = embed.astype(jnp.float32)
    xn = x / jnp.maximum(jnp.linalg.norm(x, axis=-1, keepdims=True), eps)
    en = e / jnp.maximum(jnp.linalg.norm(e, axis=-1, keepdims=True), eps)
    d = jnp.linalg.norm(xn[:, None, :] - en[None, :, :], axis=-1)
    dists = 2.0 * jnp.square(jnp.arcsin(d / 2.0))
    w = jnp.asarray(weight, jnp.float32)
    return jnp.abs(w) * jnp.mean(dists * jnp.sign(w))


if __name__ == "__main__":
    key = jax.random.PRNGKey(0)
    k_in, k_emb, k_in2, k_emb2 = jax.random.split(key, 4)

    fwd = jax.jit(prompt_forward)

    # Case 1: small shapes consistent with the module (batch of embedding rows
    # vs. a couple of prompt embeddings), single tile, in-kernel embed norm.
    x = jax.random.normal(k_in, (8, 32), dtype=jnp.float32)        # (B, D)
    embed = jax.random.normal(k_emb, (2, 32), dtype=jnp.float32)   # (E, D)
    loss = jax.block_until_ready(fwd(x, embed, 1.0))
    assert loss.shape == ()
    assert bool(jnp.isfinite(loss))
    ref = jax.block_until_ready(_prompt_forward_ref(x, embed, 1.0))
    assert bool(jnp.allclose(loss, ref, rtol=2e-3, atol=1e-4)), (loss, ref)

    # Case 2: CLIP-like feature dim, multi-tile ragged batch, negative weight
    # (exercises the parallel grid, row masking and host-side embed norm).
    x2 = jax.random.normal(k_in2, (100, 512), dtype=jnp.float32)
    embed2 = jax.random.normal(k_emb2, (3, 512), dtype=jnp.float32)
    loss2 = jax.block_until_ready(fwd(x2, embed2, -2.0))
    ref2 = jax.block_until_ready(_prompt_forward_ref(x2, embed2, -2.0))
    assert bool(jnp.isfinite(loss2))
    assert bool(jnp.allclose(loss2, ref2, rtol=2e-3, atol=1e-4)), (loss2, ref2)

    print("KERNEL_OK")
</pallas_src>

<mosaic_0001>
module attributes {stable_mosaic.version = 11 : i64} {
  func.func @_prompt_kernel(%arg0: i32, %arg1: memref<8x32xf32, #tpu.memory_space<vmem>>, %arg2: memref<2x32xf32, #tpu.memory_space<vmem>>, %arg3: memref<8x1xf32, #tpu.memory_space<vmem>>) attributes {dimension_semantics = [#tpu.dimension_semantics<parallel>], iteration_bounds = array<i64: 1>, scalar_prefetch = 0 : i64, scratch_operands = 0 : i64, tpu.core_type = #tpu.core_type<tc>, window_params = [{transform_indices = @transform_0, window_bounds = array<i64: 8, 32>}, {pipeline_mode = #tpu.pipeline_mode<synchronous>, transform_indices = @transform_1, window_bounds = array<i64: 2, 32>}, {transform_indices = @transform_2, window_bounds = array<i64: 8, 1>}]} {
    %c0 = arith.constant 0 : index
    %c0_0 = arith.constant 0 : index
    %0 = vector.load %arg1[%c0, %c0_0] : memref<8x32xf32, #tpu.memory_space<vmem>>, vector<8x32xf32>
    %1 = arith.mulf %0, %0 : vector<8x32xf32>
    %cst = arith.constant dense<0.000000e+00> : vector<8xf32>
    %2 = vector.multi_reduction <add>, %1, %cst [1] : vector<8x32xf32> to vector<8xf32>
    %3 = vector.shape_cast %2 : vector<8xf32> to vector<8x1xf32>
    %cst_1 = arith.constant 1.000000e-24 : f32
    %4 = vector.broadcast %cst_1 : f32 to vector<8x1xf32>
    %5 = arith.maximumf %3, %4 : vector<8x1xf32>
    %6 = math.rsqrt %5 : vector<8x1xf32>
    %7 = vector.broadcast %6 : vector<8x1xf32> to vector<8x32xf32>
    %8 = arith.mulf %0, %7 : vector<8x32xf32>
    %c0_2 = arith.constant 0 : index
    %c0_3 = arith.constant 0 : index
    %9 = vector.load %arg2[%c0_2, %c0_3] : memref<2x32xf32, #tpu.memory_space<vmem>>, vector<2x32xf32>
    %10 = arith.mulf %9, %9 : vector<2x32xf32>
    %cst_4 = arith.constant dense<0.000000e+00> : vector<2xf32>
    %11 = vector.multi_reduction <add>, %10, %cst_4 [1] : vector<2x32xf32> to vector<2xf32>
    %12 = vector.shape_cast %11 : vector<2xf32> to vector<2x1xf32>
    %cst_5 = arith.constant 1.000000e-24 : f32
    %13 = vector.broadcast %cst_5 : f32 to vector<2x1xf32>
    %14 = arith.maximumf %12, %13 : vector<2x1xf32>
    %15 = math.rsqrt %14 : vector<2x1xf32>
    %16 = vector.broadcast %15 : vector<2x1xf32> to vector<2x32xf32>
    %17 = arith.mulf %9, %16 : vector<2x32xf32>
    %cst_6 = arith.constant dense<0.000000e+00> : vector<8x2xf32>
    %18 = tpu.matmul %8, %17, %cst_6 {dimension_numbers = #tpu.dot_dimension_numbers<[1], [1], [0], [0], [0, 0, 1, 0], [], []>} : vector<8x32xf32>, vector<2x32xf32>, vector<8x2xf32> -> vector<8x2xf32>
    %cst_7 = arith.constant -1.000000e+00 : f32
    %cst_8 = arith.constant 1.000000e+00 : f32
    %19 = vector.broadcast %cst_7 : f32 to vector<8x2xf32>
    %20 = arith.maximumf %19, %18 : vector<8x2xf32>
    %21 = vector.broadcast %cst_8 : f32 to vector<8x2xf32>
    %22 = arith.minimumf %21, %20 : vector<8x2xf32>
    %cst_9 = arith.constant 1.000000e+00 : f32
    %23 = vector.broadcast %cst_9 : f32 to vector<8x2xf32>
    %24 = arith.subf %23, %22 : vector<8x2xf32>
    %cst_10 = arith.constant 5.000000e-01 : f32
    %25 = vector.broadcast %cst_10 : f32 to vector<8x2xf32>
    %26 = arith.mulf %25, %24 : vector<8x2xf32>
    %27 = math.sqrt %26 : vector<8x2xf32>
    %cst_11 = arith.constant 5.000000e-01 : f32
    %28 = vector.broadcast %cst_11 : f32 to vector<8x2xf32>
    %29 = arith.cmpf ogt, %27, %28 : vector<8x2xf32>
    %cst_12 = arith.constant 1.000000e+00 : f32
    %30 = vector.broadcast %cst_12 : f32 to vector<8x2xf32>
    %31 = arith.subf %30, %27 : vector<8x2xf32>
    %cst_13 = arith.constant 5.000000e-01 : f32
    %32 = vector.broadcast %cst_13 : f32 to vector<8x2xf32>
    %33 = arith.mulf %32, %31 : vector<8x2xf32>
    %34 = arith.mulf %27, %27 : vector<8x2xf32>
    %35 = arith.select %29, %33, %34 : vector<8x2xi1>, vector<8x2xf32>
    %36 = math.sqrt %33 : vector<8x2xf32>
    %37 = arith.select %29, %36, %27 : vector<8x2xi1>, vector<8x2xf32>
    %cst_14 = arith.constant 4.216320e-02 : f32
    %38 = vector.broadcast %cst_14 : f32 to vector<8x2xf32>
    %39 = arith.mulf %38, %35 : vector<8x2xf32>
    %cst_15 = arith.constant 0.024181312 : f32
    %40 = vector.broadcast %cst_15 : f32 to vector<8x2xf32>
    %41 = arith.addf %39, %40 : vector<8x2xf32>
    %42 = arith.mulf %41, %35 : vector<8x2xf32>
    %cst_16 = arith.constant 0.0454700254 : f32
    %43 = vector.broadcast %cst_16 : f32 to vector<8x2xf32>
    %44 = arith.addf %42, %43 : vector<8x2xf32>
    %45 = arith.mulf %44, %35 : vector<8x2xf32>
    %cst_17 = arith.constant 0.0749530047 : f32
    %46 = vector.broadcast %cst_17 : f32 to vector<8x2xf32>
    %47 = arith.addf %45, %46 : vector<8x2xf32>
    %48 = arith.mulf %47, %35 : vector<8x2xf32>
    %cst_18 = arith.constant 0.166667521 : f32
    %49 = vector.broadcast %cst_18 : f32 to vector<8x2xf32>
    %50 = arith.addf %48, %49 : vector<8x2xf32>
    %51 = arith.mulf %35, %50 : vector<8x2xf32>
    %52 = arith.mulf %37, %51 : vector<8x2xf32>
    %53 = arith.addf %37, %52 : vector<8x2xf32>
    %cst_19 = arith.constant 2.000000e+00 : f32
    %54 = vector.broadcast %cst_19 : f32 to vector<8x2xf32>
    %55 = arith.mulf %54, %53 : vector<8x2xf32>
    %cst_20 = arith.constant 1.57079637 : f32
    %56 = vector.broadcast %cst_20 : f32 to vector<8x2xf32>
    %57 = arith.subf %56, %55 : vector<8x2xf32>
    %58 = arith.select %29, %57, %53 : vector<8x2xi1>, vector<8x2xf32>
    %59 = arith.mulf %58, %58 : vector<8x2xf32>
    %cst_21 = arith.constant 2.000000e+00 : f32
    %60 = vector.broadcast %cst_21 : f32 to vector<8x2xf32>
    %61 = arith.mulf %60, %59 : vector<8x2xf32>
    %cst_22 = arith.constant dense<0.000000e+00> : vector<8xf32>
    %62 = vector.multi_reduction <add>, %61, %cst_22 [1] : vector<8x2xf32> to vector<8xf32>
    %63 = vector.shape_cast %62 : vector<8xf32> to vector<8x1xf32>
    %c0_23 = arith.constant 0 : index
    %c0_24 = arith.constant 0 : index
    %64 = vector.load %arg3[%c0_23, %c0_24] : memref<8x1xf32, #tpu.memory_space<vmem>>, vector<8x1xf32>
    tpu.vector_store %arg3[%c0_23, %c0_24], %63 {strides = array<i32>} : memref<8x1xf32, #tpu.memory_space<vmem>>, vector<8x1xf32>,
    return
  }
  func.func @transform_0(%arg0: i32) -> (i32, i32) {
    %c0_i32 = arith.constant 0 : i32
    %c0_i32_0 = arith.constant 0 : i32
    return %arg0, %c0_i32 : i32, i32
  }
  func.func @transform_1(%arg0: i32) -> (i32, i32) {
    %c0_i32 = arith.constant 0 : i32
    %c0_i32_0 = arith.constant 0 : i32
    %c0_i32_1 = arith.constant 0 : i32
    return %c0_i32, %c0_i32_0 : i32, i32
  }
  func.func @transform_2(%arg0: i32) -> (i32, i32) {
    %c0_i32 = arith.constant 0 : i32
    %c0_i32_0 = arith.constant 0 : i32
    return %arg0, %c0_i32 : i32, i32
  }
}

</mosaic_0001>

<llo_original>
// kernel: prompt_forward.1
$region0: #{prompt_forward.1}
  #allocation0 [shape = 'u32[]', space=smem, size = 0x4, offset = 0x4, fixed_abs, tag = 'smem constant byte address 0x4 - core index']
  #allocation1 [shape = 'u32[72,128]{1,0:T(1,128)}', space=vmem, size = 0x9000, scoped, tag = 'internal scratch']
  %s0 = inlined_call_operand.hbm [shape: f32[8,32], index: 0, kind: input, shape index: {}]
  %s1 = inlined_call_operand.hbm [shape: f32[2,32], index: 1, kind: input, shape index: {}]
  %s2 = inlined_call_operand.vmem [shape: f32[8,1], index: 2, kind: output, shape index: {}]
  %s3 = sld [smem:[#allocation0]]
  $region26: #{prompt_forward.1} parent=0
    _
  %s5 = ssub.s32 1, %s3
  %s6 = scalar_select 0, %s5, %s3
  $region1: #{prompt_forward.1} parent=0
    #allocation2 [shape = 'u8[4096]{0}', space=vmem, size = 0x1000, scoped, tag = 'input window, operand 0, single buffered']
    #allocation3 [shape = 's32[1]{0}', space=sflag, size = 0x4, scoped, tag = 'scoped memory for prompt_forward.1']
    #allocation4 [shape = 'u8[1024]{0}', space=vmem, size = 0x400, scoped, tag = 'input window, operand 1, single buffered']
    #allocation5 [shape = 's32[1]{0}', space=sflag, size = 0x4, scoped, tag = 'scoped memory for prompt_forward.1']
    %7 = vsyncpa [#allocation3], 0
    %8 = vsyncpa [#allocation5], 0
    // Predicated region
    $region2: #{prompt_forward.1} parent=1 // pred_check
      _
    $region3: #{prompt_forward.1} parent=1 // pred_check_branch
      %10 = sbr.rel (0) target = $region5
    $region4: #{prompt_forward.1} parent=1 // pred_region
      %12 = vsyncadd [#allocation3], 0
      %s14 = sshll.u32 %s0, 4
      %s15 = int_to_ptr.hbm [resolvable:$true] %s14
      %s16 = sshll.u32 [#allocation2], 4
      %s17 = int_to_ptr.vmem [resolvable:$true] %s16
      %19 = dma.hbm_to_vmem [thread:$0]  %s15, 128, %s17, [#allocation3]
    $region5: #{prompt_forward.1} parent=1 // pred_fallthru
      _
    // Predicated region
    $region6: #{prompt_forward.1} parent=1 // pred_check
      _
    $region7: #{prompt_forward.1} parent=1 // pred_check_branch
      %21 = sbr.rel (0) target = $region9
    $region8: #{prompt_forward.1} parent=1 // pred_region
      %23 = vsyncadd [#allocation5], 0
      %s25 = sshll.u32 %s1, 4
      %s26 = int_to_ptr.hbm [resolvable:$true] %s25
      %s27 = sshll.u32 [#allocation4], 4
      %s28 = int_to_ptr.vmem [resolvable:$true] %s27
      %30 = dma.hbm_to_vmem [thread:$0]  %s26, 32, %s28, [#allocation5]
    $region9: #{prompt_forward.1} parent=1 // pred_fallthru
      _
    // Predicated region
    $region10: #{prompt_forward.1} parent=1 // pred_check
      _
    $region11: #{prompt_forward.1} parent=1 // pred_check_branch
      %32 = sbr.rel (0) target = $region13
    $region12: #{prompt_forward.1} parent=1 // pred_region
      %34 = dma.done [#allocation3], 128
    $region13: #{prompt_forward.1} parent=1 // pred_fallthru
      _
    // Predicated region
    $region14: #{prompt_forward.1} parent=1 // pred_check
      _
    $region15: #{prompt_forward.1} parent=1 // pred_check_branch
      %36 = sbr.rel (0) target = $region17
    $region16: #{prompt_forward.1} parent=1 // pred_region
      %38 = dma.done [#allocation5], 32
    $region17: #{prompt_forward.1} parent=1 // pred_fallthru
      _
    %v39 = vld [vmem:[#allocation2] sm:$0xff]
    %v40 = vmul.f32 %v39, %v39
    %vm41 = vcmask 261120
    %v42 = vsel %vm41, %v40, 0.0
    %43 = vadd.xlane.f32.xlu0 %v42
    %v44 = vpop.xlane.xlu0 %43
    %v45 = vmax.f32 %v44, 1e-24
    %v46 = vrsqrt.pop %v45
    %v47 = vmul.f32 %v46, %v45
    %v48 = vmul.f32 %v47, %v46
    %v49 = vmul.f32 0.5, %v48
    %v50 = vsub.f32 1.5, %v49
    %v51 = vmul.f32 %v46, %v50
    %vm52 = vweird.f32 %v45
    %vm53 = vweird.f32 %v46
    %vm54 = vmor %vm52, %vm53
    %v55 = vsel %vm54, %v46, %v51
    %v56 = vmul.f32 %v39, %v55
    %v57 = vld [vmem:[#allocation4] sm:$0x3]
    %v58 = vmul.f32 %v57, %v57
    %vm59 = vcmask 254976
    %v60 = vsel %vm59, %v58, 0.0
    %61 = vadd.xlane.f32.xlu0 %v60
    %v62 = vpop.xlane.xlu0 %61
    %v63 = vmax.f32 %v62, 1e-24
    %v64 = vrsqrt.pop %v63
    %v65 = vmul.f32 %v64, %v63
    %v66 = vmul.f32 %v65, %v64
    %v67 = vmul.f32 0.5, %v66
    %v68 = vsub.f32 1.5, %v67
    %v69 = vmul.f32 %v64, %v68
    %vm70 = vweird.f32 %v63
    %vm71 = vweird.f32 %v64
    %vm72 = vmor %vm70, %vm71
    %v73 = vsel %vm72, %v64, %v69
    %v74 = vmul.f32 %v57, %v73
    %v76 = vsel %vm41, %v56, 0
    %v79 = vsel %vm41, %v74, 0
    %81 = vmatpush.xpose.msra.mxu0 0.0
    %82 = vmatpush.xpose.msra.mxu0 0.0
    %83 = vmatpush.xpose.msra.mxu0 0.0
    %84 = vmatpush.xpose.msra.mxu0 0.0
    %85 = vmatpush.xpose.msra.mxu0 0.0
    %86 = vmatpush.xpose.msra.mxu0 0.0
    %87 = vmatpush.xpose.msra.mxu0 0.0
    %88 = vmatpush.xpose.msra.mxu0 0.0
    %89 = vmatpush.xpose.msra.mxu0 0.0
    %90 = vmatpush.xpose.msra.mxu0 0.0
    %91 = vmatpush.xpose.msra.mxu0 0.0
    %92 = vmatpush.xpose.msra.mxu0 0.0
    %93 = vmatpush.xpose.msra.mxu0 0.0
    %94 = vmatpush.xpose.msra.mxu0 0.0
    %95 = vmatpush.xpose.msra.mxu0 0.0
    %96 = vmatpush.xpose.msra.mxu0 %v79
    %97 = vmatmul.f32.gmra.mxu0 %v76
    %v98 = vpop.f32.mrf.mxu0
    %v99 = vadd.f32 0.0, %v98
    %100 = vdwg.mxu0
    %v101 = vmax.f32 %v99, -1.0
    %v102 = vmin.f32 %v101, 1.0
    %v103 = vsub.f32 1.0, %v102
    %v104 = vmul.f32 %v103, 0.5
    %v105 = vrsqrt.pop %v104
    %v106 = vmul.f32 %v105, %v104
    %v107 = vmul.f32 %v106, %v105
    %v108 = vmul.f32 0.5, %v107
    %v109 = vsub.f32 1.5, %v108
    %v110 = vmul.f32 %v105, %v109
    %v111 = vmul.f32 %v104, %v110
    %vm112 = vcmp.eq.f32.partialorder %v104, inf
    %v113 = vsel %vm112, %v104, %v111
    %vm114 = vcmp.eq.f32.partialorder %v104, 0.0
    %v115 = vand.u32 %v104, 2147483648
    %v116 = vsel %vm114, %v115, %v113
    %vm117 = vcmp.gt.f32.partialorder %v116, 0.5
    %v118 = vsub.f32 1.0, %v116
    %v119 = vmul.f32 %v118, 0.5
    %v120 = vmul.f32 %v116, %v116
    %v121 = vsel %vm117, %v119, %v120
    %v122 = vrsqrt.pop %v119
    %v123 = vmul.f32 %v122, %v119
    %v124 = vmul.f32 %v123, %v122
    %v125 = vmul.f32 0.5, %v124
    %v126 = vsub.f32 1.5, %v125
    %v127 = vmul.f32 %v122, %v126
    %v128 = vmul.f32 %v119, %v127
    %vm129 = vcmp.eq.f32.partialorder %v119, inf
    %v130 = vsel %vm129, %v119, %v128
    %vm131 = vcmp.eq.f32.partialorder %v119, 0.0
    %v132 = vand.u32 %v119, 2147483648
    %v133 = vsel %vm131, %v132, %v130
    %v134 = vsel %vm117, %v133, %v116
    %v135 = vmul.f32 %v121, 0.0421632
    %v136 = vadd.f32 %v135, 0.024181312
    %v137 = vmul.f32 %v136, %v121
    %v138 = vadd.f32 %v137, 0.045470025
    %v139 = vmul.f32 %v138, %v121
    %v140 = vadd.f32 %v139, 0.074953005
    %v141 = vmul.f32 %v140, %v121
    %v142 = vadd.f32 %v141, 0.16666752
    %v143 = vmul.f32 %v121, %v142
    %v144 = vmul.f32 %v134, %v143
    %v145 = vadd.f32 %v134, %v144
    %v146 = vmul.f32 %v145, 2.0
    %v147 = vsub.f32 1.5707964, %v146
    %v148 = vsel %vm117, %v147, %v145
    %v149 = vmul.f32 %v148, %v148
    %v150 = vmul.f32 %v149, 2.0
    %vm151 = vcmask 15360
    %v152 = vsel %vm151, %v150, 0.0
    %153 = vadd.xlane.f32.xlu0 %v152
    %v154 = vpop.xlane.xlu0 %153
    %vm155 = vcmask 7168
    %156 = vst.msk [vmem:[%s2] sm:$0xff] %vm155, %v154
    // Predicated region
    $region18: #{prompt_forward.1} parent=1 // pred_check
      _
    $region19: #{prompt_forward.1} parent=1 // pred_check_branch
      %158 = sbr.rel (0) target = $region21
    $region20: #{prompt_forward.1} parent=1 // pred_region
      _
    $region21: #{prompt_forward.1} parent=1 // pred_fallthru
      _
    // Predicated region
    $region22: #{prompt_forward.1} parent=1 // pred_check
      _
    $region23: #{prompt_forward.1} parent=1 // pred_check_branch
      %160 = sbr.rel (0) target = $region25
    $region24: #{prompt_forward.1} parent=1 // pred_region
      _
    $region25: #{prompt_forward.1} parent=1 // pred_fallthru
      _
    %161 = vsyncpa [#allocation3], 1
    %162 = vsyncpa [#allocation5], 1

</llo_original>
